<compile_context>
chip_gen: v6e
topology: v6e:2x2x1
jax: 0.10.0
libtpu: 0.0.40
codegen_flags: <defaults>
</compile_context>

<pallas_src>
import functools
import warnings

import jax
import jax.numpy as jnp
from jax.experimental import pallas as pl
from jax.experimental.pallas import tpu as pltpu


def _rope_kernel(cos_ref, sin_ref, q_ref, k_ref, qo_ref, ko_ref, *, rot_half):
    # cos_ref / sin_ref              : (tile_s, rot_half) float32 (shared across head tiles)
    # q_ref / k_ref / qo_ref / ko_ref: (tile_h, tile_s, headdim)
    cos = cos_ref[...]        # broadcast over the head axis below
    sin = sin_ref[...]

    def rotate(x_ref, o_ref):
        x = x_ref[...].astype(jnp.float32)                 # (tile_h, tile_s, D)
        x0 = x[..., :rot_half]
        x1 = x[..., rot_half:2 * rot_half]
        o0 = x0 * cos - x1 * sin
        o1 = x1 * cos + x0 * sin
        pieces = [o0, o1]
        if 2 * rot_half < x.shape[-1]:
            pieces.append(x[..., 2 * rot_half:])           # pass-through tail (== identity)
        # Single full-lane-width result -> dense (unmasked) store.
        o_ref[...] = jnp.concatenate(pieces, axis=-1).astype(o_ref.dtype)

    rotate(q_ref, qo_ref)
    rotate(k_ref, ko_ref)


def _choose_tiles(H, S, D, itemsize, budget_bytes=2 * 1024 * 1024):
    """Pick (tile_h, tile_s): the largest q/k tile under `budget_bytes`,
    preferring full-head tiles, with tile_s a multiple of 8 (or == S)."""
    row = D * itemsize
    s_cands = [d for d in range(min(S, 1024), 0, -1)
               if S % d == 0 and (d % 8 == 0 or d == S)]
    if not s_cands:  # e.g. S > 1024 with no multiple-of-8 divisor
        s_cands = [d for d in range(min(S, 1024), 0, -1) if S % d == 0]
    h_cands = [d for d in range(H, 0, -1) if H % d == 0]

    best = (1, s_cands[-1])
    best_key = (-1, -1)
    for ts in s_cands:
        for th in h_cands:
            if th * ts * row <= budget_bytes:
                key = (th * ts, th)          # biggest tile; tie-break: more heads per tile
                if key > best_key:
                    best_key, best = key, (th, ts)
                break                        # h_cands is descending: first fit is largest
    return best


@functools.partial(jax.jit,
                   static_argnames=("max_seqlen", "dim", "base"),
                   donate_argnums=(0, 1))
def fast_rotary_embedding(q, k, position_ids, *, max_seqlen, dim, base=10000.0):
    """Apply rotary embedding in place to q and k. Returns (q_rot, k_rot)."""
    B, H, S, D = q.shape
    assert k.shape == (B, H, S, D)
    assert dim % 2 == 0 and dim <= D
    rh = dim // 2

    # --- cos/sin cache + per-token gather (== F.embedding); pos_idx_in_fp32=True ---
    inv_freq = 1.0 / (base ** (jnp.arange(0, dim, 2, dtype=jnp.float32) / dim))   # (rh,)
    t = jnp.arange(max_seqlen, dtype=jnp.float32)
    freqs = jnp.einsum("i,j->ij", t, inv_freq)                                    # (max_seqlen, rh)
    cos_g = jnp.cos(freqs)[position_ids]                                          # (B, S, rh) f32
    sin_g = jnp.sin(freqs)[position_ids]                                          # (B, S, rh) f32

    tile_h, tile_s = _choose_tiles(H, S, D, q.dtype.itemsize)
    # Head axis innermost so the per-sequence cos/sin blocks are reused across head tiles.
    grid = (B, S // tile_s, H // tile_h)

    qk_spec = pl.BlockSpec((None, tile_h, tile_s, D), lambda b, s, h: (b, h, s, 0))
    cs_spec = pl.BlockSpec((None, tile_s, rh), lambda b, s, h: (b, s, 0))

    # Explicit scoped-VMEM budget: 2x double-buffered (q,k in + q,k out) tiles,
    # headroom for the f32 temporaries, capped safely below v7x's 64 MiB physical VMEM.
    tile_bytes = tile_h * tile_s * D * q.dtype.itemsize
    f32_tile_bytes = tile_h * tile_s * D * 4
    vmem_limit = int(min(48 * 2**20,
                         max(32 * 2**20,
                             8 * tile_bytes + 4 * f32_tile_bytes + 8 * 2**20)))

    kernel = functools.partial(_rope_kernel, rot_half=rh)

    q_out, k_out = pl.pallas_call(
        kernel,
        grid=grid,
        in_specs=[cs_spec, cs_spec, qk_spec, qk_spec],
        out_specs=(qk_spec, qk_spec),
        out_shape=(jax.ShapeDtypeStruct(q.shape, q.dtype),
                   jax.ShapeDtypeStruct(k.shape, k.dtype)),
        input_output_aliases={2: 0, 3: 1},   # RoPE is in place: q -> q_out, k -> k_out
        compiler_params=pltpu.CompilerParams(
            dimension_semantics=("parallel", "parallel", "parallel"),
            vmem_limit_bytes=vmem_limit),
    )(cos_g, sin_g, q, k)
    return q_out, k_out


def _reference(q, k, position_ids, *, max_seqlen, dim, base=10000.0):
    """Pure-JAX reference (fp32 cos/sin math, cast back to input dtype)."""
    rh = dim // 2
    inv_freq = 1.0 / (base ** (jnp.arange(0, dim, 2, dtype=jnp.float32) / dim))
    t = jnp.arange(max_seqlen, dtype=jnp.float32)
    freqs = jnp.einsum("i,j->ij", t, inv_freq)
    cos = jnp.cos(freqs)[position_ids][:, None]   # (B, 1, S, rh) f32
    sin = jnp.sin(freqs)[position_ids][:, None]

    def rot(x):
        xf = x.astype(jnp.float32)
        x0, x1, rest = xf[..., :rh], xf[..., rh:2 * rh], xf[..., 2 * rh:]
        out = jnp.concatenate([x0 * cos - x1 * sin, x0 * sin + x1 * cos, rest], axis=-1)
        return out.astype(x.dtype)

    return rot(q), rot(k)


if __name__ == "__main__":
    # Donation is a no-op (with a warning) on backends that don't support it;
    # keep the log clean either way.
    warnings.filterwarnings("ignore", message=".*donated.*")
    warnings.filterwarnings("ignore", message=".*[Dd]onation.*")

    # Small shapes consistent with the module: rotary dim < headdim so the
    # pass-through channel path is exercised as well.
    B, H, S, D = 2, 4, 16, 128
    dim = 64
    max_seqlen = 32

    key = jax.random.PRNGKey(0)
    kq, kk, kp = jax.random.split(key, 3)
    q = jax.random.normal(kq, (B, H, S, D), dtype=jnp.float32)
    k = jax.random.normal(kk, (B, H, S, D), dtype=jnp.float32)
    position_ids = jax.random.randint(kp, (B, S), 0, max_seqlen, dtype=jnp.int32)

    # Compute the reference first: q/k are donated (consumed) by the kernel call.
    q_ref, k_ref = _reference(q, k, position_ids, max_seqlen=max_seqlen, dim=dim)
    jax.block_until_ready((q_ref, k_ref))

    q_out, k_out = fast_rotary_embedding(q, k, position_ids,
                                         max_seqlen=max_seqlen, dim=dim)
    jax.block_until_ready((q_out, k_out))

    assert jnp.allclose(q_out, q_ref, atol=1e-5, rtol=1e-5)
    assert jnp.allclose(k_out, k_ref, atol=1e-5, rtol=1e-5)

    print("KERNEL_OK")
</pallas_src>

<mosaic_0001>
module attributes {stable_mosaic.version = 11 : i64} {
  func.func @_rope_kernel(%arg0: i32, %arg1: i32, %arg2: i32, %arg3: memref<1x16x32xf32, #tpu.memory_space<vmem>>, %arg4: memref<1x16x32xf32, #tpu.memory_space<vmem>>, %arg5: memref<1x4x16x128xf32, #tpu.memory_space<vmem>>, %arg6: memref<1x4x16x128xf32, #tpu.memory_space<vmem>>, %arg7: memref<1x4x16x128xf32, #tpu.memory_space<vmem>>, %arg8: memref<1x4x16x128xf32, #tpu.memory_space<vmem>>) attributes {dimension_semantics = [#tpu.dimension_semantics<parallel>, #tpu.dimension_semantics<parallel>, #tpu.dimension_semantics<parallel>], iteration_bounds = array<i64: 2, 1, 1>, scalar_prefetch = 0 : i64, scratch_operands = 0 : i64, tpu.core_type = #tpu.core_type<tc>, window_params = [{transform_indices = @transform_0, window_bounds = array<i64: 1, 16, 32>}, {transform_indices = @transform_1, window_bounds = array<i64: 1, 16, 32>}, {transform_indices = @transform_2, window_bounds = array<i64: 1, 4, 16, 128>}, {transform_indices = @transform_3, window_bounds = array<i64: 1, 4, 16, 128>}, {transform_indices = @transform_4, window_bounds = array<i64: 1, 4, 16, 128>}, {transform_indices = @transform_5, window_bounds = array<i64: 1, 4, 16, 128>}]} {
    %c0 = arith.constant 0 : index
    %c0_0 = arith.constant 0 : index
    %c0_1 = arith.constant 0 : index
    %0 = vector.load %arg3[%c0, %c0_0, %c0_1] : memref<1x16x32xf32, #tpu.memory_space<vmem>>, vector<1x16x32xf32>
    %1 = vector.shape_cast %0 : vector<1x16x32xf32> to vector<16x32xf32>
    %c0_2 = arith.constant 0 : index
    %c0_3 = arith.constant 0 : index
    %c0_4 = arith.constant 0 : index
    %2 = vector.load %arg4[%c0_2, %c0_3, %c0_4] : memref<1x16x32xf32, #tpu.memory_space<vmem>>, vector<1x16x32xf32>
    %3 = vector.shape_cast %2 : vector<1x16x32xf32> to vector<16x32xf32>
    %c0_5 = arith.constant 0 : index
    %c0_6 = arith.constant 0 : index
    %c0_7 = arith.constant 0 : index
    %c0_8 = arith.constant 0 : index
    %4 = vector.load %arg5[%c0_5, %c0_6, %c0_7, %c0_8] : memref<1x4x16x128xf32, #tpu.memory_space<vmem>>, vector<1x4x16x128xf32>
    %5 = vector.shape_cast %4 : vector<1x4x16x128xf32> to vector<4x16x128xf32>
    %6 = vector.extract_strided_slice %5 {offsets = [0, 0, 0], sizes = [4, 16, 32], strides = [1, 1, 1]} : vector<4x16x128xf32> to vector<4x16x32xf32>
    %7 = vector.extract_strided_slice %5 {offsets = [0, 0, 32], sizes = [4, 16, 32], strides = [1, 1, 1]} : vector<4x16x128xf32> to vector<4x16x32xf32>
    %8 = vector.shape_cast %1 : vector<16x32xf32> to vector<1x16x32xf32>
    %9 = vector.broadcast %8 : vector<1x16x32xf32> to vector<4x16x32xf32>
    %10 = arith.mulf %6, %9 : vector<4x16x32xf32>
    %11 = vector.shape_cast %3 : vector<16x32xf32> to vector<1x16x32xf32>
    %12 = vector.broadcast %11 : vector<1x16x32xf32> to vector<4x16x32xf32>
    %13 = arith.mulf %7, %12 : vector<4x16x32xf32>
    %14 = arith.subf %10, %13 : vector<4x16x32xf32>
    %15 = vector.shape_cast %1 : vector<16x32xf32> to vector<1x16x32xf32>
    %16 = vector.broadcast %15 : vector<1x16x32xf32> to vector<4x16x32xf32>
    %17 = arith.mulf %7, %16 : vector<4x16x32xf32>
    %18 = vector.shape_cast %3 : vector<16x32xf32> to vector<1x16x32xf32>
    %19 = vector.broadcast %18 : vector<1x16x32xf32> to vector<4x16x32xf32>
    %20 = arith.mulf %6, %19 : vector<4x16x32xf32>
    %21 = arith.addf %17, %20 : vector<4x16x32xf32>
    %22 = vector.extract_strided_slice %5 {offsets = [0, 0, 64], sizes = [4, 16, 64], strides = [1, 1, 1]} : vector<4x16x128xf32> to vector<4x16x64xf32>
    %23 = tpu.concatenate %14, %21, %22 in 2 : vector<4x16x32xf32>, vector<4x16x32xf32>, vector<4x16x64xf32> -> vector<4x16x128xf32>
    %c0_9 = arith.constant 0 : index
    %c0_10 = arith.constant 0 : index
    %c0_11 = arith.constant 0 : index
    %c0_12 = arith.constant 0 : index
    %24 = vector.load %arg7[%c0_9, %c0_10, %c0_11, %c0_12] : memref<1x4x16x128xf32, #tpu.memory_space<vmem>>, vector<1x4x16x128xf32>
    %25 = vector.shape_cast %24 : vector<1x4x16x128xf32> to vector<4x16x128xf32>
    %26 = vector.shape_cast %23 : vector<4x16x128xf32> to vector<1x4x16x128xf32>
    tpu.vector_store %arg7[%c0_9, %c0_10, %c0_11, %c0_12], %26 {strides = array<i32>} : memref<1x4x16x128xf32, #tpu.memory_space<vmem>>, vector<1x4x16x128xf32>,
    %c0_13 = arith.constant 0 : index
    %c0_14 = arith.constant 0 : index
    %c0_15 = arith.constant 0 : index
    %c0_16 = arith.constant 0 : index
    %27 = vector.load %arg6[%c0_13, %c0_14, %c0_15, %c0_16] : memref<1x4x16x128xf32, #tpu.memory_space<vmem>>, vector<1x4x16x128xf32>
    %28 = vector.shape_cast %27 : vector<1x4x16x128xf32> to vector<4x16x128xf32>
    %29 = vector.extract_strided_slice %28 {offsets = [0, 0, 0], sizes = [4, 16, 32], strides = [1, 1, 1]} : vector<4x16x128xf32> to vector<4x16x32xf32>
    %30 = vector.extract_strided_slice %28 {offsets = [0, 0, 32], sizes = [4, 16, 32], strides = [1, 1, 1]} : vector<4x16x128xf32> to vector<4x16x32xf32>
    %31 = vector.shape_cast %1 : vector<16x32xf32> to vector<1x16x32xf32>
    %32 = vector.broadcast %31 : vector<1x16x32xf32> to vector<4x16x32xf32>
    %33 = arith.mulf %29, %32 : vector<4x16x32xf32>
    %34 = vector.shape_cast %3 : vector<16x32xf32> to vector<1x16x32xf32>
    %35 = vector.broadcast %34 : vector<1x16x32xf32> to vector<4x16x32xf32>
    %36 = arith.mulf %30, %35 : vector<4x16x32xf32>
    %37 = arith.subf %33, %36 : vector<4x16x32xf32>
    %38 = vector.shape_cast %1 : vector<16x32xf32> to vector<1x16x32xf32>
    %39 = vector.broadcast %38 : vector<1x16x32xf32> to vector<4x16x32xf32>
    %40 = arith.mulf %30, %39 : vector<4x16x32xf32>
    %41 = vector.shape_cast %3 : vector<16x32xf32> to vector<1x16x32xf32>
    %42 = vector.broadcast %41 : vector<1x16x32xf32> to vector<4x16x32xf32>
    %43 = arith.mulf %29, %42 : vector<4x16x32xf32>
    %44 = arith.addf %40, %43 : vector<4x16x32xf32>
    %45 = vector.extract_strided_slice %28 {offsets = [0, 0, 64], sizes = [4, 16, 64], strides = [1, 1, 1]} : vector<4x16x128xf32> to vector<4x16x64xf32>
    %46 = tpu.concatenate %37, %44, %45 in 2 : vector<4x16x32xf32>, vector<4x16x32xf32>, vector<4x16x64xf32> -> vector<4x16x128xf32>
    %c0_17 = arith.constant 0 : index
    %c0_18 = arith.constant 0 : index
    %c0_19 = arith.constant 0 : index
    %c0_20 = arith.constant 0 : index
    %47 = vector.load %arg8[%c0_17, %c0_18, %c0_19, %c0_20] : memref<1x4x16x128xf32, #tpu.memory_space<vmem>>, vector<1x4x16x128xf32>
    %48 = vector.shape_cast %47 : vector<1x4x16x128xf32> to vector<4x16x128xf32>
    %49 = vector.shape_cast %46 : vector<4x16x128xf32> to vector<1x4x16x128xf32>
    tpu.vector_store %arg8[%c0_17, %c0_18, %c0_19, %c0_20], %49 {strides = array<i32>} : memref<1x4x16x128xf32, #tpu.memory_space<vmem>>, vector<1x4x16x128xf32>,
    return
  }
  func.func @transform_0(%arg0: i32, %arg1: i32, %arg2: i32) -> (i32, i32, i32) {
    %c0_i32 = arith.constant 0 : i32
    %c0_i32_0 = arith.constant 0 : i32
    return %arg0, %arg1, %c0_i32 : i32, i32, i32
  }
  func.func @transform_1(%arg0: i32, %arg1: i32, %arg2: i32) -> (i32, i32, i32) {
    %c0_i32 = arith.constant 0 : i32
    %c0_i32_0 = arith.constant 0 : i32
    return %arg0, %arg1, %c0_i32 : i32, i32, i32
  }
  func.func @transform_2(%arg0: i32, %arg1: i32, %arg2: i32) -> (i32, i32, i32, i32) {
    %c0_i32 = arith.constant 0 : i32
    %c0_i32_0 = arith.constant 0 : i32
    return %arg0, %arg2, %arg1, %c0_i32 : i32, i32, i32, i32
  }
  func.func @transform_3(%arg0: i32, %arg1: i32, %arg2: i32) -> (i32, i32, i32, i32) {
    %c0_i32 = arith.constant 0 : i32
    %c0_i32_0 = arith.constant 0 : i32
    return %arg0, %arg2, %arg1, %c0_i32 : i32, i32, i32, i32
  }
  func.func @transform_4(%arg0: i32, %arg1: i32, %arg2: i32) -> (i32, i32, i32, i32) {
    %c0_i32 = arith.constant 0 : i32
    %c0_i32_0 = arith.constant 0 : i32
    return %arg0, %arg2, %arg1, %c0_i32 : i32, i32, i32, i32
  }
  func.func @transform_5(%arg0: i32, %arg1: i32, %arg2: i32) -> (i32, i32, i32, i32) {
    %c0_i32 = arith.constant 0 : i32
    %c0_i32_0 = arith.constant 0 : i32
    return %arg0, %arg2, %arg1, %c0_i32 : i32, i32, i32, i32
  }
}

</mosaic_0001>

<llo_original>
// kernel: fast_rotary_embedding.1
$region0: #{fast_rotary_embedding.1}
  #allocation0 [shape = 'u32[]', space=smem, size = 0x4, offset = 0x4, fixed_abs, tag = 'smem constant byte address 0x4 - core index']
  #allocation1 [shape = 'u32[144,128]{1,0:T(1,128)}', space=vmem, size = 0x12000, scoped, tag = 'internal scratch']
  %s0 = inlined_call_operand.vmem [shape: f32[2,16,32], index: 0, kind: input, shape index: {}]
  %s1 = inlined_call_operand.vmem [shape: f32[2,16,32], index: 1, kind: input, shape index: {}]
  %s2 = inlined_call_operand.hbm [shape: f32[2,4,16,128], index: 2, kind: input, shape index: {}, may-alias: {2,4}]
  %s3 = inlined_call_operand.hbm [shape: f32[2,4,16,128], index: 3, kind: input, shape index: {}, may-alias: {3,5}]
  %s4 = inlined_call_operand.hbm [shape: f32[2,4,16,128], index: 4, kind: output, shape index: {0}, may-alias: {2,4}]
  %s5 = inlined_call_operand.hbm [shape: f32[2,4,16,128], index: 5, kind: output, shape index: {1}, may-alias: {3,5}]
  %6 = xla_tuple %s4, %s5
  %s7 = sld [smem:[#allocation0]]
  $region65: #{fast_rotary_embedding.1} parent=0
    _
  %s9 = ssub.s32 1, %s7
  %s10 = scalar_select 0, %s9, %s7
  $region1: #{fast_rotary_embedding.1} parent=0
    #allocation2 [shape = 'u8[65536]{0}', space=vmem, size = 0x10000, scoped, tag = 'input window, operand 2']
    #allocation3 [shape = 's32[2]{0}', space=sflag, size = 0x8, scoped, tag = 'scoped memory for fast_rotary_embedding.1']
    #allocation4 [shape = 's32[2]{0}', space=sflag, size = 0x8, scoped, tag = 'scoped memory for fast_rotary_embedding.1']
    #allocation5 [shape = 'u8[65536]{0}', space=vmem, size = 0x10000, scoped, tag = 'input window, operand 3']
    #allocation6 [shape = 's32[2]{0}', space=sflag, size = 0x8, scoped, tag = 'scoped memory for fast_rotary_embedding.1']
    #allocation7 [shape = 'u8[65536]{0}', space=vmem, size = 0x10000, scoped, tag = 'output window, operand 0']
    #allocation8 [shape = 'u8[65536]{0}', space=vmem, size = 0x10000, scoped, tag = 'output window, operand 1']
    #allocation9 [shape = 's32[2]{0}', space=sflag, size = 0x8, scoped, tag = 'scoped memory for fast_rotary_embedding.1']
    %11 = vsyncpa [#allocation3], 0
    %s12 = scalar_lea.sflag [#allocation3], 1
    %13 = vsyncpa %s12, 0
    %14 = vsyncpa [#allocation6], 0
    %s15 = scalar_lea.sflag [#allocation6], 1
    %16 = vsyncpa %s15, 0
    %17 = vsyncpa [#allocation4], 0
    %s18 = scalar_lea.sflag [#allocation4], 1
    %19 = vsyncpa %s18, 0
    %20 = vsyncpa [#allocation9], 0
    %s21 = scalar_lea.sflag [#allocation9], 1
    %22 = vsyncpa %s21, 0
    loop: start=0, step=1, limit=4
    $region2: #{fast_rotary_embedding.1} parent=1 // loop_pre_header
      _
    $region3: #{fast_rotary_embedding.1} parent=1 // loop_header
      %s24 = sphi 0, %s28
      %p25 = scmp.ge.s32.totalorder %s24, 4
      %s31 = sphi 0, %s50
      %s32 = sphi 0, %s46
      %s33 = sphi 0, %s42
      %s34 = sphi 0, %s31
      %s35 = sphi 0, %s32
      %s36 = sphi 0, %s33
      %s37 = sphi 0, %s34
      %s38 = sphi 0, %s35
      %s39 = sphi 0, %s36
      %s55 = sphi 0, %s57
      %s58 = sphi 0, %s55
      %s59 = sphi 0, %s58
      %s75 = sphi 0, %s59
      %s83 = sphi 0, %s85
      %s86 = sphi 0, %s83
      %s87 = sphi 0, %s86
      %s103 = sphi 0, %s87
      %s113 = sphi 0, %s115
      %s116 = sphi 0, %s113
      %s117 = sphi 0, %s116
      %s133 = sphi 0, %s117
      %s143 = sphi 0, %s145
      %s146 = sphi 0, %s143
      %s147 = sphi 0, %s146
      %s163 = sphi 0, %s147
      %s173 = sphi 0, %s175
      %s176 = sphi 0, %s173
      %s177 = sphi 0, %s176
      %s193 = sphi 0, %s177
      %s203 = sphi 0, %s205
      %s206 = sphi 0, %s203
      %s207 = sphi 0, %s206
      %s223 = sphi 0, %s207
    $region4: #{fast_rotary_embedding.1} parent=1 // loop_header_branch
      %27 = sbr.rel (%p25) target = $region8
    $region5: #{fast_rotary_embedding.1} parent=1 // loop_body
      %s29 = ssub.s32 %s24, 1
      %s30 = ssub.s32 %s24, 2
      %s40 = sadd.s32 1, %s33
      %p41 = scmp.ge.s32.totalorder %s40, 1
      %s42 = scalar_select %p41, 0, %s40
      %s43 = sadd.s32 1, %s32
      %s44 = scalar_select %p41, %s43, %s32
      %p45 = scmp.ge.s32.totalorder %s44, 1
      %s46 = scalar_select %p45, 0, %s44
      %s47 = sadd.s32 1, %s31
      %s48 = scalar_select %p45, %s47, %s31
      %p49 = scmp.ge.s32.totalorder %s48, 2
      %s50 = scalar_select %p49, 0, %s48
      %s51 = ssub.s32 %s31, %s50
      %s52 = ssub.s32 %s32, %s46
      %s53 = sor.u32 %s51, %s52
      %p54 = scmp.eq.s32.totalorder %s53, 0
      %s56 = sadd.s32 %s55, 1
      %s57 = scalar_select %p54, %s55, %s56
      %p60 = pneg %p54
      %p61 = scmp.eq.s32.totalorder %s24, 1
      %p62 = por %p60, %p61
      %p63 = scmp.ne.s32.totalorder %s55, %s58
      %p64 = scmp.eq.s32.totalorder %s24, 0
      %p65 = por %p63, %p64
      %p66 = scmp.ne.s32.totalorder %s55, %s58
      %p67 = scmp.eq.s32.totalorder %s29, 1
      %p68 = por %p66, %p67
      %p69 = scmp.ne.s32.totalorder %s58, %s59
      %p70 = scmp.eq.s32.totalorder %s29, 0
      %p71 = por %p69, %p70
      %p72 = scmp.ne.s32.totalorder %s58, %s59
      %p73 = scmp.eq.s32.totalorder %s30, 1
      %p74 = por %p72, %p73
      %p76 = scmp.ne.s32.totalorder %s59, %s75
      %p77 = scmp.eq.s32.totalorder %s30, 0
      %p78 = por %p76, %p77
      %s79 = ssub.s32 %s31, %s50
      %s80 = ssub.s32 %s32, %s46
      %s81 = sor.u32 %s79, %s80
      %p82 = scmp.eq.s32.totalorder %s81, 0
      %s84 = sadd.s32 %s83, 1
      %s85 = scalar_select %p82, %s83, %s84
      %p88 = pneg %p82
      %p89 = scmp.eq.s32.totalorder %s24, 1
      %p90 = por %p88, %p89
      %p91 = scmp.ne.s32.totalorder %s83, %s86
      %p92 = scmp.eq.s32.totalorder %s24, 0
      %p93 = por %p91, %p92
      %p94 = scmp.ne.s32.totalorder %s83, %s86
      %p95 = scmp.eq.s32.totalorder %s29, 1
      %p96 = por %p94, %p95
      %p97 = scmp.ne.s32.totalorder %s86, %s87
      %p98 = scmp.eq.s32.totalorder %s29, 0
      %p99 = por %p97, %p98
      %p100 = scmp.ne.s32.totalorder %s86, %s87
      %p101 = scmp.eq.s32.totalorder %s30, 1
      %p102 = por %p100, %p101
      %p104 = scmp.ne.s32.totalorder %s87, %s103
      %p105 = scmp.eq.s32.totalorder %s30, 0
      %p106 = por %p104, %p105
      %s107 = ssub.s32 %s31, %s50
      %s108 = ssub.s32 %s33, %s42
      %s109 = sor.u32 %s107, %s108
      %s110 = ssub.s32 %s32, %s46
      %s111 = sor.u32 %s109, %s110
      %p112 = scmp.eq.s32.totalorder %s111, 0
      %s114 = sadd.s32 %s113, 1
      %s115 = scalar_select %p112, %s113, %s114
      %p118 = pneg %p112
      %p119 = scmp.eq.s32.totalorder %s24, 1
      %p120 = por %p118, %p119
      %p121 = scmp.ne.s32.totalorder %s113, %s116
      %p122 = scmp.eq.s32.totalorder %s24, 0
      %p123 = por %p121, %p122
      %p124 = scmp.ne.s32.totalorder %s113, %s116
      %p125 = scmp.eq.s32.totalorder %s29, 1
      %p126 = por %p124, %p125
      %p127 = scmp.ne.s32.totalorder %s116, %s117
      %p128 = scmp.eq.s32.totalorder %s29, 0
      %p129 = por %p127, %p128
      %p130 = scmp.ne.s32.totalorder %s116, %s117
      %p131 = scmp.eq.s32.totalorder %s30, 1
      %p132 = por %p130, %p131
      %p134 = scmp.ne.s32.totalorder %s117, %s133
      %p135 = scmp.eq.s32.totalorder %s30, 0
      %p136 = por %p134, %p135
      %s137 = ssub.s32 %s31, %s50
      %s138 = ssub.s32 %s33, %s42
      %s139 = sor.u32 %s137, %s138
      %s140 = ssub.s32 %s32, %s46
      %s141 = sor.u32 %s139, %s140
      %p142 = scmp.eq.s32.totalorder %s141, 0
      %s144 = sadd.s32 %s143, 1
      %s145 = scalar_select %p142, %s143, %s144
      %p148 = pneg %p142
      %p149 = scmp.eq.s32.totalorder %s24, 1
      %p150 = por %p148, %p149
      %p151 = scmp.ne.s32.totalorder %s143, %s146
      %p152 = scmp.eq.s32.totalorder %s24, 0
      %p153 = por %p151, %p152
      %p154 = scmp.ne.s32.totalorder %s143, %s146
      %p155 = scmp.eq.s32.totalorder %s29, 1
      %p156 = por %p154, %p155
      %p157 = scmp.ne.s32.totalorder %s146, %s147
      %p158 = scmp.eq.s32.totalorder %s29, 0
      %p159 = por %p157, %p158
      %p160 = scmp.ne.s32.totalorder %s146, %s147
      %p161 = scmp.eq.s32.totalorder %s30, 1
      %p162 = por %p160, %p161
      %p164 = scmp.ne.s32.totalorder %s147, %s163
      %p165 = scmp.eq.s32.totalorder %s30, 0
      %p166 = por %p164, %p165
      %s167 = ssub.s32 %s31, %s50
      %s168 = ssub.s32 %s33, %s42
      %s169 = sor.u32 %s167, %s168
      %s170 = ssub.s32 %s32, %s46
      %s171 = sor.u32 %s169, %s170
      %p172 = scmp.eq.s32.totalorder %s171, 0
      %s174 = sadd.s32 %s173, 1
      %s175 = scalar_select %p172, %s173, %s174
      %p178 = pneg %p172
      %p179 = scmp.eq.s32.totalorder %s24, 1
      %p180 = por %p178, %p179
      %p181 = scmp.ne.s32.totalorder %s173, %s176
      %p182 = scmp.eq.s32.totalorder %s24, 0
      %p183 = por %p181, %p182
      %p184 = scmp.ne.s32.totalorder %s173, %s176
      %p185 = scmp.eq.s32.totalorder %s29, 1
      %p186 = por %p184, %p185
      %p187 = scmp.ne.s32.totalorder %s176, %s177
      %p188 = scmp.eq.s32.totalorder %s29, 0
      %p189 = por %p187, %p188
      %p190 = scmp.ne.s32.totalorder %s176, %s177
      %p191 = scmp.eq.s32.totalorder %s30, 1
      %p192 = por %p190, %p191
      %p194 = scmp.ne.s32.totalorder %s177, %s193
      %p195 = scmp.eq.s32.totalorder %s30, 0
      %p196 = por %p194, %p195
      %s197 = ssub.s32 %s31, %s50
      %s198 = ssub.s32 %s33, %s42
      %s199 = sor.u32 %s197, %s198
      %s200 = ssub.s32 %s32, %s46
      %s201 = sor.u32 %s199, %s200
      %p202 = scmp.eq.s32.totalorder %s201, 0
      %s204 = sadd.s32 %s203, 1
      %s205 = scalar_select %p202, %s203, %s204
      %p208 = pneg %p202
      %p209 = scmp.eq.s32.totalorder %s24, 1
      %p210 = por %p208, %p209
      %p211 = scmp.ne.s32.totalorder %s203, %s206
      %p212 = scmp.eq.s32.totalorder %s24, 0
      %p213 = por %p211, %p212
      %p214 = scmp.ne.s32.totalorder %s203, %s206
      %p215 = scmp.eq.s32.totalorder %s29, 1
      %p216 = por %p214, %p215
      %p217 = scmp.ne.s32.totalorder %s206, %s207
      %p218 = scmp.eq.s32.totalorder %s29, 0
      %p219 = por %p217, %p218
      %p220 = scmp.ne.s32.totalorder %s206, %s207
      %p221 = scmp.eq.s32.totalorder %s30, 1
      %p222 = por %p220, %p221
      %p224 = scmp.ne.s32.totalorder %s207, %s223
      %p225 = scmp.eq.s32.totalorder %s30, 0
      %p226 = por %p224, %p225
      %p227 = scmp.le.s32.totalorder 1, %s24
      %p228 = scmp.lt.s32.totalorder %s24, 3
      %p229 = pnand %p227, %p228
      %p230 = pneg %p229
      // Predicated region
      $region9: #{fast_rotary_embedding.1} parent=5 // pred_check
        _
      $region10: #{fast_rotary_embedding.1} parent=5 // pred_check_branch
        %232 = sbr.rel (%p229) target = $region12
      $region11: #{fast_rotary_embedding.1} parent=5 // pred_region
        %s233 = ssub.s32 %s24, 1
      $region12: #{fast_rotary_embedding.1} parent=5 // pred_fallthru
        _
      %p234 = scmp.lt.s32.totalorder %s24, 2
      // Predicated region
      $region13: #{fast_rotary_embedding.1} parent=5 // pred_check
        %p235 = pneg %p234
      $region14: #{fast_rotary_embedding.1} parent=5 // pred_check_branch
        %237 = sbr.rel (%p235) target = $region16
      $region15: #{fast_rotary_embedding.1} parent=5 // pred_region
        // Predicated region
        $region17: #{fast_rotary_embedding.1} parent=15 // pred_check
          %p238 = pneg %p65
        $region18: #{fast_rotary_embedding.1} parent=15 // pred_check_branch
          %240 = sbr.rel (%p238) target = $region20
        $region19: #{fast_rotary_embedding.1} parent=15 // pred_region
          %s241 = smul.u32 2, %s32
          %p242 = scmp.lt.s32.totalorder %s31, 1
          %s243 = scalar_select %p242, %s31, 1
          %p244 = scmp.lt.s32.totalorder %s241, 1
          %s245 = scalar_select %p244, %s241, 1
          %s246 = smul.addr %s243, 2
          %s247 = sadd.s32 %s245, %s246
          %s248 = smul.addr %s247, 8
          %s249 = scalar_lea.vmem %s0, %s248
          %s250 = smul.u32 2, %s32
        $region20: #{fast_rotary_embedding.1} parent=15 // pred_fallthru
          _
        // Predicated region
        $region21: #{fast_rotary_embedding.1} parent=15 // pred_check
          %p251 = pneg %p93
        $region22: #{fast_rotary_embedding.1} parent=15 // pred_check_branch
          %253 = sbr.rel (%p251) target = $region24
        $region23: #{fast_rotary_embedding.1} parent=15 // pred_region
          %s254 = smul.u32 2, %s32
          %p255 = scmp.lt.s32.totalorder %s31, 1
          %s256 = scalar_select %p255, %s31, 1
          %p257 = scmp.lt.s32.totalorder %s254, 1
          %s258 = scalar_select %p257, %s254, 1
          %s259 = smul.addr %s256, 2
          %s260 = sadd.s32 %s258, %s259
          %s261 = smul.addr %s260, 8
          %s262 = scalar_lea.vmem %s1, %s261
          %s263 = smul.u32 2, %s32
        $region24: #{fast_rotary_embedding.1} parent=15 // pred_fallthru
          _
        // Predicated region
        $region25: #{fast_rotary_embedding.1} parent=15 // pred_check
          %p264 = pneg %p123
        $region26: #{fast_rotary_embedding.1} parent=15 // pred_check_branch
          %266 = sbr.rel (%p264) target = $region28
        $region27: #{fast_rotary_embedding.1} parent=15 // pred_region
          %s267 = sand.u32 %s113, 1
          %s268 = scalar_lea.sflag [#allocation3], %s267
          %s269 = sand.u32 %s113, 1
          %s270 = smul.addr %s269, 64
          %s271 = scalar_lea.vmem [#allocation2], %s270
          %s272 = smul.u32 4, %s33
          %s273 = smul.u32 2, %s32
          %s275 = ssub.s32 1024, 1024
          %276 = vsyncadd %s268, %s275
          %s277 = smul.addr %s272, 2
          %s278 = sadd.s32 %s273, %s277
          %s279 = smul.addr %s31, 8
          %s280 = sadd.s32 %s278, %s279
          %s281 = smul.addr %s280, 128
          %s282 = scalar_lea.hbm %s2, %s281
          %s283 = sshll.u32 %s271, 4
          %s284 = int_to_ptr.vmem [resolvable:$true] %s283
          %289 = dma.hbm_to_vmem [thread:$0]  %s282, 1024, %s284, %s268, 128, 128, 8
        $region28: #{fast_rotary_embedding.1} parent=15 // pred_fallthru
          _
        // Predicated region
        $region29: #{fast_rotary_embedding.1} parent=15 // pred_check
          %p290 = pneg %p153
        $region30: #{fast_rotary_embedding.1} parent=15 // pred_check_branch
          %292 = sbr.rel (%p290) target = $region32
        $region31: #{fast_rotary_embedding.1} parent=15 // pred_region
          %s293 = sand.u32 %s143, 1
          %s294 = scalar_lea.sflag [#allocation6], %s293
          %s295 = sand.u32 %s143, 1
          %s296 = smul.addr %s295, 64
          %s297 = scalar_lea.vmem [#allocation5], %s296
          %s298 = smul.u32 4, %s33
          %s299 = smul.u32 2, %s32
          %s301 = ssub.s32 1024, 1024
          %302 = vsyncadd %s294, %s301
          %s303 = smul.addr %s298, 2
          %s304 = sadd.s32 %s299, %s303
          %s305 = smul.addr %s31, 8
          %s306 = sadd.s32 %s304, %s305
          %s307 = smul.addr %s306, 128
          %s308 = scalar_lea.hbm %s3, %s307
          %s309 = sshll.u32 %s297, 4
          %s310 = int_to_ptr.vmem [resolvable:$true] %s309
          %315 = dma.hbm_to_vmem [thread:$0]  %s308, 1024, %s310, %s294, 128, 128, 8
        $region32: #{fast_rotary_embedding.1} parent=15 // pred_fallthru
          _
      $region16: #{fast_rotary_embedding.1} parent=5 // pred_fallthru
        _
      %p316 = scmp.le.s32.totalorder 1, %s24
      %p317 = scmp.lt.s32.totalorder %s24, 3
      %p318 = pnand %p316, %p317
      %p319 = pneg %p318
      // Predicated region
      $region33: #{fast_rotary_embedding.1} parent=5 // pred_check
        _
      $region34: #{fast_rotary_embedding.1} parent=5 // pred_check_branch
        %321 = sbr.rel (%p318) target = $region36
      $region35: #{fast_rotary_embedding.1} parent=5 // pred_region
        %s322 = ssub.s32 %s24, 1
        %s323 = sand.u32 %s116, 1
        %s324 = scalar_lea.sflag [#allocation3], %s323
        %s325 = sand.u32 %s116, 1
        %s326 = smul.addr %s325, 64
        %s327 = scalar_lea.vmem [#allocation2], %s326
        // Predicated region
        $region37: #{fast_rotary_embedding.1} parent=35 // pred_check
          %p328 = pneg %p129
        $region38: #{fast_rotary_embedding.1} parent=35 // pred_check_branch
          %330 = sbr.rel (%p328) target = $region40
        $region39: #{fast_rotary_embedding.1} parent=35 // pred_region
          %331 = dma.done %s324, 1024
        $region40: #{fast_rotary_embedding.1} parent=35 // pred_fallthru
          _
        %s332 = sand.u32 %s146, 1
        %s333 = scalar_lea.sflag [#allocation6], %s332
        %s334 = sand.u32 %s146, 1
        %s335 = smul.addr %s334, 64
        %s336 = scalar_lea.vmem [#allocation5], %s335
        // Predicated region
        $region41: #{fast_rotary_embedding.1} parent=35 // pred_check
          %p337 = pneg %p159
        $region42: #{fast_rotary_embedding.1} parent=35 // pred_check_branch
          %339 = sbr.rel (%p337) target = $region44
        $region43: #{fast_rotary_embedding.1} parent=35 // pred_region
          %340 = dma.done %s333, 1024
        $region44: #{fast_rotary_embedding.1} parent=35 // pred_fallthru
          _
        %s341 = smul.u32 2, %s35
        %p342 = scmp.lt.s32.totalorder %s34, 1
        %s343 = scalar_select %p342, %s34, 1
        %p344 = scmp.lt.s32.totalorder %s341, 1
        %s345 = scalar_select %p344, %s341, 1
        %s346 = smul.addr %s343, 2
        %s347 = sadd.s32 %s345, %s346
        %s348 = smul.addr %s347, 8
        %s349 = scalar_lea.vmem %s0, %s348
        %p350 = pneg %p71
        %p351 = pneg %p68
        %s352 = smul.u32 2, %s35
        %p353 = scmp.lt.s32.totalorder %s34, 1
        %s354 = scalar_select %p353, %s34, 1
        %p355 = scmp.lt.s32.totalorder %s352, 1
        %s356 = scalar_select %p355, %s352, 1
        %s357 = smul.addr %s354, 2
        %s358 = sadd.s32 %s356, %s357
        %s359 = smul.addr %s358, 8
        %s360 = scalar_lea.vmem %s1, %s359
        %p361 = pneg %p99
        %p362 = pneg %p96
        %s363 = sand.u32 %s116, 1
        %s364 = scalar_lea.sflag [#allocation3], %s363
        %s365 = sand.u32 %s116, 1
        %s366 = smul.addr %s365, 64
        %s367 = scalar_lea.vmem [#allocation2], %s366
        %p368 = pneg %p129
        %p369 = pneg %p126
        %s370 = sand.u32 %s146, 1
        %s371 = scalar_lea.sflag [#allocation6], %s370
        %s372 = sand.u32 %s146, 1
        %s373 = smul.addr %s372, 64
        %s374 = scalar_lea.vmem [#allocation5], %s373
        %p375 = pneg %p159
        %p376 = pneg %p156
        %p377 = pneg %p189
        %p378 = pneg %p186
        %s379 = sand.u32 %s176, 1
        %s380 = scalar_lea.sflag [#allocation4], %s379
        %s381 = sand.u32 %s176, 1
        %s382 = smul.addr %s381, 64
        %s383 = scalar_lea.vmem [#allocation7], %s382
        %p384 = pneg %p219
        %p385 = pneg %p216
        %s386 = sand.u32 %s206, 1
        %s387 = scalar_lea.sflag [#allocation9], %s386
        %s388 = sand.u32 %s206, 1
        %s389 = smul.addr %s388, 64
        %s390 = scalar_lea.vmem [#allocation8], %s389
        %s391 = smul.u32 2, %s35
        %p392 = scmp.lt.s32.totalorder %s34, 1
        %s393 = scalar_select %p392, %s34, 1
        %p394 = scmp.lt.s32.totalorder %s391, 1
        %s395 = scalar_select %p394, %s391, 1
        %s396 = smul.addr %s393, 2
        %s397 = sadd.s32 %s395, %s396
        %s398 = smul.addr %s397, 8
        %s399 = scalar_lea.vmem %s0, %s398
        %s400 = smul.u32 2, %s35
        %s401 = smul.u32 2, %s35
        %p402 = scmp.lt.s32.totalorder %s34, 1
        %s403 = scalar_select %p402, %s34, 1
        %p404 = scmp.lt.s32.totalorder %s401, 1
        %s405 = scalar_select %p404, %s401, 1
        %s406 = smul.addr %s403, 2
        %s407 = sadd.s32 %s405, %s406
        %s408 = smul.addr %s407, 8
        %s409 = scalar_lea.vmem %s1, %s408
        %s410 = smul.u32 2, %s35
        %s411 = smul.u32 4, %s36
        %s412 = smul.u32 2, %s35
        %s413 = smul.u32 4, %s36
        %s414 = smul.u32 2, %s35
        %s415 = smul.u32 4, %s36
        %s416 = smul.u32 2, %s35
        %s417 = smul.u32 4, %s36
        %s418 = smul.u32 2, %s35
        %v419 = vld [vmem:[%s399] sm:$0xff]
        %v420 = vld [vmem:[%s399 + $0x8] sm:$0xff]
        %v421 = vld [vmem:[%s409] sm:$0xff]
        %v422 = vld [vmem:[%s409 + $0x8] sm:$0xff]
        %v423 = vld [vmem:[%s327] sm:$0xff]
        %v424 = vld [vmem:[%s327 + $0x8] sm:$0xff]
        %v425 = vld [vmem:[%s327 + $0x10] sm:$0xff]
        %v426 = vld [vmem:[%s327 + $0x18] sm:$0xff]
        %v427 = vld [vmem:[%s327 + $0x20] sm:$0xff]
        %v428 = vld [vmem:[%s327 + $0x28] sm:$0xff]
        %v429 = vld [vmem:[%s327 + $0x30] sm:$0xff]
        %v430 = vld [vmem:[%s327 + $0x38] sm:$0xff]
        %v431 = vmul.f32 %v423, %v419
        %v432 = vmul.f32 %v424, %v420
        %v433 = vmul.f32 %v425, %v419
        %v434 = vmul.f32 %v426, %v420
        %v435 = vmul.f32 %v427, %v419
        %v436 = vmul.f32 %v428, %v420
        %v437 = vmul.f32 %v429, %v419
        %v438 = vmul.f32 %v430, %v420
        %441 = vrot.lane.b32.xlu0 %v421, 32
        %v442 = vpop.permute.xlu0 %441
        %443 = vrot.lane.b32.xlu0 %v422, 32
        %v444 = vpop.permute.xlu0 %443
        %v447 = vmul.f32 %v423, %v442
        %v448 = vmul.f32 %v424, %v444
        %v449 = vmul.f32 %v425, %v442
        %v450 = vmul.f32 %v426, %v444
        %v451 = vmul.f32 %v427, %v442
        %v452 = vmul.f32 %v428, %v444
        %v453 = vmul.f32 %v429, %v442
        %v454 = vmul.f32 %v430, %v444
        %463 = vrot.lane.b32.xlu0 %v447, 96
        %v464 = vpop.permute.xlu0 %463
        %465 = vrot.lane.b32.xlu0 %v448, 96
        %v466 = vpop.permute.xlu0 %465
        %467 = vrot.lane.b32.xlu0 %v449, 96
        %v468 = vpop.permute.xlu0 %467
        %469 = vrot.lane.b32.xlu0 %v450, 96
        %v470 = vpop.permute.xlu0 %469
        %471 = vrot.lane.b32.xlu0 %v451, 96
        %v472 = vpop.permute.xlu0 %471
        %473 = vrot.lane.b32.xlu0 %v452, 96
        %v474 = vpop.permute.xlu0 %473
        %475 = vrot.lane.b32.xlu0 %v453, 96
        %v476 = vpop.permute.xlu0 %475
        %477 = vrot.lane.b32.xlu0 %v454, 96
        %v478 = vpop.permute.xlu0 %477
        %v487 = vsub.f32 %v431, %v464
        %v488 = vsub.f32 %v432, %v466
        %v489 = vsub.f32 %v433, %v468
        %v490 = vsub.f32 %v434, %v470
        %v491 = vsub.f32 %v435, %v472
        %v492 = vsub.f32 %v436, %v474
        %v493 = vsub.f32 %v437, %v476
        %v494 = vsub.f32 %v438, %v478
        %497 = vrot.lane.b32.xlu0 %v419, 32
        %v498 = vpop.permute.xlu0 %497
        %499 = vrot.lane.b32.xlu0 %v420, 32
        %v500 = vpop.permute.xlu0 %499
        %v503 = vmul.f32 %v423, %v498
        %v504 = vmul.f32 %v424, %v500
        %v505 = vmul.f32 %v425, %v498
        %v506 = vmul.f32 %v426, %v500
        %v507 = vmul.f32 %v427, %v498
        %v508 = vmul.f32 %v428, %v500
        %v509 = vmul.f32 %v429, %v498
        %v510 = vmul.f32 %v430, %v500
        %v511 = vmul.f32 %v423, %v421
        %v512 = vmul.f32 %v424, %v422
        %v513 = vmul.f32 %v425, %v421
        %v514 = vmul.f32 %v426, %v422
        %v515 = vmul.f32 %v427, %v421
        %v516 = vmul.f32 %v428, %v422
        %v517 = vmul.f32 %v429, %v421
        %v518 = vmul.f32 %v430, %v422
        %527 = vrot.lane.b32.xlu0 %v511, 32
        %v528 = vpop.permute.xlu0 %527
        %529 = vrot.lane.b32.xlu0 %v512, 32
        %v530 = vpop.permute.xlu0 %529
        %531 = vrot.lane.b32.xlu0 %v513, 32
        %v532 = vpop.permute.xlu0 %531
        %533 = vrot.lane.b32.xlu0 %v514, 32
        %v534 = vpop.permute.xlu0 %533
        %535 = vrot.lane.b32.xlu0 %v515, 32
        %v536 = vpop.permute.xlu0 %535
        %537 = vrot.lane.b32.xlu0 %v516, 32
        %v538 = vpop.permute.xlu0 %537
        %539 = vrot.lane.b32.xlu0 %v517, 32
        %v540 = vpop.permute.xlu0 %539
        %541 = vrot.lane.b32.xlu0 %v518, 32
        %v542 = vpop.permute.xlu0 %541
        %v551 = vadd.f32 %v503, %v528
        %v552 = vadd.f32 %v504, %v530
        %v553 = vadd.f32 %v505, %v532
        %v554 = vadd.f32 %v506, %v534
        %v555 = vadd.f32 %v507, %v536
        %v556 = vadd.f32 %v508, %v538
        %v557 = vadd.f32 %v509, %v540
        %v558 = vadd.f32 %v510, %v542
        %vm559 = vcmask 261120
        %v560 = vsel %vm559, %v487, %v551
        %v561 = vsel %vm559, %v488, %v552
        %v562 = vsel %vm559, %v489, %v553
        %v563 = vsel %vm559, %v490, %v554
        %v564 = vsel %vm559, %v491, %v555
        %v565 = vsel %vm559, %v492, %v556
        %v566 = vsel %vm559, %v493, %v557
        %v567 = vsel %vm559, %v494, %v558
        %vm568 = vcmask 523264
        %v569 = vsel %vm568, %v560, %v423
        %v570 = vsel %vm568, %v561, %v424
        %v571 = vsel %vm568, %v562, %v425
        %v572 = vsel %vm568, %v563, %v426
        %v573 = vsel %vm568, %v564, %v427
        %v574 = vsel %vm568, %v565, %v428
        %v575 = vsel %vm568, %v566, %v429
        %v576 = vsel %vm568, %v567, %v430
        %577 = vst [vmem:[%s383] sm:$0xff] %v569
        %578 = vst [vmem:[%s383 + $0x8] sm:$0xff] %v570
        %579 = vst [vmem:[%s383 + $0x10] sm:$0xff] %v571
        %580 = vst [vmem:[%s383 + $0x18] sm:$0xff] %v572
        %581 = vst [vmem:[%s383 + $0x20] sm:$0xff] %v573
        %582 = vst [vmem:[%s383 + $0x28] sm:$0xff] %v574
        %583 = vst [vmem:[%s383 + $0x30] sm:$0xff] %v575
        %584 = vst [vmem:[%s383 + $0x38] sm:$0xff] %v576
        %v585 = vld [vmem:[%s336] sm:$0xff]
        %v586 = vld [vmem:[%s336 + $0x8] sm:$0xff]
        %v587 = vld [vmem:[%s336 + $0x10] sm:$0xff]
        %v588 = vld [vmem:[%s336 + $0x18] sm:$0xff]
        %v589 = vld [vmem:[%s336 + $0x20] sm:$0xff]
        %v590 = vld [vmem:[%s336 + $0x28] sm:$0xff]
        %v591 = vld [vmem:[%s336 + $0x30] sm:$0xff]
        %v592 = vld [vmem:[%s336 + $0x38] sm:$0xff]
        %v593 = vmul.f32 %v585, %v419
        %v594 = vmul.f32 %v586, %v420
        %v595 = vmul.f32 %v587, %v419
        %v596 = vmul.f32 %v588, %v420
        %v597 = vmul.f32 %v589, %v419
        %v598 = vmul.f32 %v590, %v420
        %v599 = vmul.f32 %v591, %v419
        %v600 = vmul.f32 %v592, %v420
        %v601 = vmul.f32 %v585, %v442
        %v602 = vmul.f32 %v586, %v444
        %v603 = vmul.f32 %v587, %v442
        %v604 = vmul.f32 %v588, %v444
        %v605 = vmul.f32 %v589, %v442
        %v606 = vmul.f32 %v590, %v444
        %v607 = vmul.f32 %v591, %v442
        %v608 = vmul.f32 %v592, %v444
        %617 = vrot.lane.b32.xlu0 %v601, 96
        %v618 = vpop.permute.xlu0 %617
        %619 = vrot.lane.b32.xlu0 %v602, 96
        %v620 = vpop.permute.xlu0 %619
        %621 = vrot.lane.b32.xlu0 %v603, 96
        %v622 = vpop.permute.xlu0 %621
        %623 = vrot.lane.b32.xlu0 %v604, 96
        %v624 = vpop.permute.xlu0 %623
        %625 = vrot.lane.b32.xlu0 %v605, 96
        %v626 = vpop.permute.xlu0 %625
        %627 = vrot.lane.b32.xlu0 %v606, 96
        %v628 = vpop.permute.xlu0 %627
        %629 = vrot.lane.b32.xlu0 %v607, 96
        %v630 = vpop.permute.xlu0 %629
        %631 = vrot.lane.b32.xlu0 %v608, 96
        %v632 = vpop.permute.xlu0 %631
        %v641 = vsub.f32 %v593, %v618
        %v642 = vsub.f32 %v594, %v620
        %v643 = vsub.f32 %v595, %v622
        %v644 = vsub.f32 %v596, %v624
        %v645 = vsub.f32 %v597, %v626
        %v646 = vsub.f32 %v598, %v628
        %v647 = vsub.f32 %v599, %v630
        %v648 = vsub.f32 %v600, %v632
        %v649 = vmul.f32 %v585, %v498
        %v650 = vmul.f32 %v586, %v500
        %v651 = vmul.f32 %v587, %v498
        %v652 = vmul.f32 %v588, %v500
        %v653 = vmul.f32 %v589, %v498
        %v654 = vmul.f32 %v590, %v500
        %v655 = vmul.f32 %v591, %v498
        %v656 = vmul.f32 %v592, %v500
        %v657 = vmul.f32 %v585, %v421
        %v658 = vmul.f32 %v586, %v422
        %v659 = vmul.f32 %v587, %v421
        %v660 = vmul.f32 %v588, %v422
        %v661 = vmul.f32 %v589, %v421
        %v662 = vmul.f32 %v590, %v422
        %v663 = vmul.f32 %v591, %v421
        %v664 = vmul.f32 %v592, %v422
        %673 = vrot.lane.b32.xlu0 %v657, 32
        %v674 = vpop.permute.xlu0 %673
        %675 = vrot.lane.b32.xlu0 %v658, 32
        %v676 = vpop.permute.xlu0 %675
        %677 = vrot.lane.b32.xlu0 %v659, 32
        %v678 = vpop.permute.xlu0 %677
        %679 = vrot.lane.b32.xlu0 %v660, 32
        %v680 = vpop.permute.xlu0 %679
        %681 = vrot.lane.b32.xlu0 %v661, 32
        %v682 = vpop.permute.xlu0 %681
        %683 = vrot.lane.b32.xlu0 %v662, 32
        %v684 = vpop.permute.xlu0 %683
        %685 = vrot.lane.b32.xlu0 %v663, 32
        %v686 = vpop.permute.xlu0 %685
        %687 = vrot.lane.b32.xlu0 %v664, 32
        %v688 = vpop.permute.xlu0 %687
        %v697 = vadd.f32 %v649, %v674
        %v698 = vadd.f32 %v650, %v676
        %v699 = vadd.f32 %v651, %v678
        %v700 = vadd.f32 %v652, %v680
        %v701 = vadd.f32 %v653, %v682
        %v702 = vadd.f32 %v654, %v684
        %v703 = vadd.f32 %v655, %v686
        %v704 = vadd.f32 %v656, %v688
        %v705 = vsel %vm559, %v641, %v697
        %v706 = vsel %vm559, %v642, %v698
        %v707 = vsel %vm559, %v643, %v699
        %v708 = vsel %vm559, %v644, %v700
        %v709 = vsel %vm559, %v645, %v701
        %v710 = vsel %vm559, %v646, %v702
        %v711 = vsel %vm559, %v647, %v703
        %v712 = vsel %vm559, %v648, %v704
        %v713 = vsel %vm568, %v705, %v585
        %v714 = vsel %vm568, %v706, %v586
        %v715 = vsel %vm568, %v707, %v587
        %v716 = vsel %vm568, %v708, %v588
        %v717 = vsel %vm568, %v709, %v589
        %v718 = vsel %vm568, %v710, %v590
        %v719 = vsel %vm568, %v711, %v591
        %v720 = vsel %vm568, %v712, %v592
        %721 = vst [vmem:[%s390] sm:$0xff] %v713
        %722 = vst [vmem:[%s390 + $0x8] sm:$0xff] %v714
        %723 = vst [vmem:[%s390 + $0x10] sm:$0xff] %v715
        %724 = vst [vmem:[%s390 + $0x18] sm:$0xff] %v716
        %725 = vst [vmem:[%s390 + $0x20] sm:$0xff] %v717
        %726 = vst [vmem:[%s390 + $0x28] sm:$0xff] %v718
        %727 = vst [vmem:[%s390 + $0x30] sm:$0xff] %v719
        %728 = vst [vmem:[%s390 + $0x38] sm:$0xff] %v720
        %s729 = sand.u32 %s176, 1
        %s730 = scalar_lea.sflag [#allocation4], %s729
        %s731 = sand.u32 %s176, 1
        %s732 = smul.addr %s731, 64
        %s733 = scalar_lea.vmem [#allocation7], %s732
        %s734 = sand.u32 %s206, 1
        %s735 = scalar_lea.sflag [#allocation9], %s734
        %s736 = sand.u32 %s206, 1
        %s737 = smul.addr %s736, 64
        %s738 = scalar_lea.vmem [#allocation8], %s737
        // Predicated region
        $region45: #{fast_rotary_embedding.1} parent=35 // pred_check
          %p739 = pneg %p186
        $region46: #{fast_rotary_embedding.1} parent=35 // pred_check_branch
          %741 = sbr.rel (%p739) target = $region48
        $region47: #{fast_rotary_embedding.1} parent=35 // pred_region
          %s742 = smul.u32 4, %s36
          %s743 = smul.u32 2, %s35
          %s745 = ssub.s32 1024, 1024
          %746 = vsyncadd %s730, %s745
          %s747 = smul.addr %s742, 2
          %s748 = sadd.s32 %s743, %s747
          %s749 = smul.addr %s34, 8
          %s750 = sadd.s32 %s748, %s749
          %s751 = smul.addr %s750, 128
          %s752 = scalar_lea.hbm %s4, %s751
          %s753 = sshll.u32 %s733, 4
          %s754 = int_to_ptr.vmem [resolvable:$true] %s753
          %759 = dma.vmem_to_hbm [thread:$0]  %s754, 1024, %s752, %s730, 128, 128, 8
        $region48: #{fast_rotary_embedding.1} parent=35 // pred_fallthru
          _
        // Predicated region
        $region49: #{fast_rotary_embedding.1} parent=35 // pred_check
          %p760 = pneg %p216
        $region50: #{fast_rotary_embedding.1} parent=35 // pred_check_branch
          %762 = sbr.rel (%p760) target = $region52
        $region51: #{fast_rotary_embedding.1} parent=35 // pred_region
          %s763 = smul.u32 4, %s36
          %s764 = smul.u32 2, %s35
          %s766 = ssub.s32 1024, 1024
          %767 = vsyncadd %s735, %s766
          %s768 = smul.addr %s763, 2
          %s769 = sadd.s32 %s764, %s768
          %s770 = smul.addr %s34, 8
          %s771 = sadd.s32 %s769, %s770
          %s772 = smul.addr %s771, 128
          %s773 = scalar_lea.hbm %s5, %s772
          %s774 = sshll.u32 %s738, 4
          %s775 = int_to_ptr.vmem [resolvable:$true] %s774
          %780 = dma.vmem_to_hbm [thread:$0]  %s775, 1024, %s773, %s735, 128, 128, 8
        $region52: #{fast_rotary_embedding.1} parent=35 // pred_fallthru
          _
      $region36: #{fast_rotary_embedding.1} parent=5 // pred_fallthru
        _
      %p781 = scmp.le.s32.totalorder 2, %s24
      // Predicated region
      $region53: #{fast_rotary_embedding.1} parent=5 // pred_check
        %p782 = pneg %p781
      $region54: #{fast_rotary_embedding.1} parent=5 // pred_check_branch
        %784 = sbr.rel (%p782) target = $region56
      $region55: #{fast_rotary_embedding.1} parent=5 // pred_region
        %s785 = ssub.s32 %s24, 2
        // Predicated region
        $region57: #{fast_rotary_embedding.1} parent=55 // pred_check
          %p786 = pneg %p192
        $region58: #{fast_rotary_embedding.1} parent=55 // pred_check_branch
          %788 = sbr.rel (%p786) target = $region60
        $region59: #{fast_rotary_embedding.1} parent=55 // pred_region
          %s789 = sand.u32 %s177, 1
          %s790 = scalar_lea.sflag [#allocation4], %s789
          %s791 = sand.u32 %s177, 1
          %s792 = smul.addr %s791, 64
          %s793 = scalar_lea.vmem [#allocation7], %s792
          %794 = dma.done %s790, 1024
        $region60: #{fast_rotary_embedding.1} parent=55 // pred_fallthru
          _
        // Predicated region
        $region61: #{fast_rotary_embedding.1} parent=55 // pred_check
          %p795 = pneg %p222
        $region62: #{fast_rotary_embedding.1} parent=55 // pred_check_branch
          %797 = sbr.rel (%p795) target = $region64
        $region63: #{fast_rotary_embedding.1} parent=55 // pred_region
          %s798 = sand.u32 %s207, 1
          %s799 = scalar_lea.sflag [#allocation9], %s798
          %s800 = sand.u32 %s207, 1
          %s801 = smul.addr %s800, 64
          %s802 = scalar_lea.vmem [#allocation8], %s801
          %803 = dma.done %s799, 1024
        $region64: #{fast_rotary_embedding.1} parent=55 // pred_fallthru
          _
      $region56: #{fast_rotary_embedding.1} parent=5 // pred_fallthru
        _
    $region6: #{fast_rotary_embedding.1} parent=1 // loop_footer
      %s28 = sadd.s32 1, %s24
    $region7: #{fast_rotary_embedding.1} parent=1 // loop_footer_branch
      %23 = sbr.rel target = $region3
    $region8: #{fast_rotary_embedding.1} parent=1 // loop_exit
      _
    %804 = vsyncpa [#allocation3], 1
    %s805 = scalar_lea.sflag [#allocation3], 1
    %806 = vsyncpa %s805, 1
    %807 = vsyncpa [#allocation6], 1
    %s808 = scalar_lea.sflag [#allocation6], 1
    %809 = vsyncpa %s808, 1
    %810 = vsyncpa [#allocation4], 1
    %s811 = scalar_lea.sflag [#allocation4], 1
    %812 = vsyncpa %s811, 1
    %813 = vsyncpa [#allocation9], 1
    %s814 = scalar_lea.sflag [#allocation9], 1
    %815 = vsyncpa %s814, 1

</llo_original>
